<compile_context>
chip_gen: v5e
topology: v5e:2x2
jax: 0.10.0
libtpu: 0.0.40
codegen_flags: <defaults>
</compile_context>

<pallas_src>
import functools

import numpy as np
import jax
import jax.numpy as jnp
from jax import lax
from jax.experimental import pallas as pl
from jax.experimental.pallas import tpu as pltpu

_NF = 32            # filters per inception branch
_KB = 40            # width of the embedded branch conv (kernel sizes 40/20/10)
_K1 = 144           # width of the embedded stage-1 conv (inc-1 branches + 17 hybrid filters)
_VMEM_LIMIT = 32 * 1024 * 1024   # ~5x the actual ~6 MiB/step footprint; safe on v5e/v6e/v7x


# ----------------------------------------------------------------------------
# pltpu.roll direction calibration (jnp.roll-like vs reversed).  Probed once,
# eagerly, by init_hinception() before any model kernel is traced; _rolled()
# asserts it happened, and the full-forward reference check in __main__ would
# catch a wrong direction loudly.
# ----------------------------------------------------------------------------
_ROLL_LIKE_JNP = True
_ROLL_CALIBRATED = False


def _roll_probe_kernel(x_ref, o_ref):
    o_ref[...] = pltpu.roll(x_ref[...], 5, axis=1)


def calibrate_roll():
    global _ROLL_LIKE_JNP, _ROLL_CALIBRATED
    if _ROLL_CALIBRATED:
        return
    x = jnp.arange(8 * 128, dtype=jnp.float32).reshape(8, 128)
    y = np.asarray(pl.pallas_call(
        _roll_probe_kernel,
        out_shape=jax.ShapeDtypeStruct((8, 128), jnp.float32))(x))
    xn = np.asarray(x)
    if np.array_equal(y, np.roll(xn, 5, axis=1)):
        _ROLL_LIKE_JNP = True
    elif np.array_equal(y, np.roll(xn, -5, axis=1)):
        _ROLL_LIKE_JNP = False
    else:
        raise RuntimeError("unexpected pltpu.roll semantics")
    _ROLL_CALIBRATED = True


# ----------------------------------------------------------------------------
# In-kernel helpers (trace-time; values are (C, L) with L on the lane axis)
# ----------------------------------------------------------------------------
def _rolled(x, s, L):
    """Lane-rotate so that column t holds x[:, (t + s) % L] (s is a static int)."""
    assert _ROLL_CALIBRATED, "calibrate_roll() must run (eagerly) before tracing"
    amt = (-s) % L if _ROLL_LIKE_JNP else s % L
    return pltpu.roll(x, amt, axis=1) if amt else x


def _valid_mask(s, L, pos):
    """(1, L) mask of columns t for which 0 <= t + s < L (single compare)."""
    if s == 0:
        return None
    return (pos < L - s) if s > 0 else (pos >= -s)


def _shift0(x, s, L, pos, mask=None):
    """out[:, t] = x[:, t + s] if in range else 0 (zero 'same' conv padding)."""
    if s == 0:
        return x
    if mask is None:
        mask = _valid_mask(s, L, pos)
    return jnp.where(mask, _rolled(x, s, L), 0.0)


def _concat_rows(rows, chunk=16):
    """Hierarchical sublane concat (keeps individual concatenates modest)."""
    if len(rows) <= chunk:
        return jnp.concatenate(rows, axis=0)
    parts = [jnp.concatenate(rows[i:i + chunk], axis=0)
             for i in range(0, len(rows), chunk)]
    return jnp.concatenate(parts, axis=0)


# ----------------------------------------------------------------------------
# The fused Hinception forward kernel (one grid step == one batch element)
# ----------------------------------------------------------------------------
def _hinception_kernel(x_ref, w1_ref,
                       bn2_ref, wc2_ref, bn3_ref, wc3_ref, bn4_ref, wc4_ref,
                       bn5_ref, wc5_ref, bn6_ref, wc6_ref,
                       lw_ref, lb_ref, o_ref, *, L):
    pos = lax.broadcasted_iota(jnp.int32, (1, L), 1)

    # Hoisted per-tap validity masks (one compare per tap), reused by all 5 modules.
    pad_b = (_KB - 1) // 2
    masks_b = tuple(_valid_mask(j - pad_b, L, pos) for j in range(_KB))
    m_lft = pos >= 1          # shift -1 stays in range
    m_rgt = pos < L - 1       # shift +1 stays in range

    def maxpool3(v):
        # MaxPool1d(kernel=3, stride=1, padding=1): out-of-range neighbours are
        # replaced by the centre value (== -inf padding for a max).
        vl = jnp.where(m_lft, _rolled(v, -1, L), v)
        vr = jnp.where(m_rgt, _rolled(v, 1, L), v)
        return jnp.maximum(jnp.maximum(v, vl), vr)

    def inception_module(xf, bn_ref, wc_ref):
        # bottleneck 1x1 -> [k=40/20/10 branch convs as ONE width-40 im2col matmul
        #                    | maxpool(3,1,1) -> 1x1 conv] -> ReLU.
        # The three branch weights and the maxpool 1x1 weight are folded offline into
        # the single block matrix wc_ref, so one MXU matmul emits all 128 output
        # channels already in the torch channel order.
        xh = xf.astype(jnp.bfloat16)                                          # (C_in, L)
        xb = jnp.dot(bn_ref[...], xh,
                     preferred_element_type=jnp.float32).astype(jnp.bfloat16)  # (32, L)
        rows = [_shift0(xb, j - pad_b, L, pos, masks_b[j]) for j in range(_KB)]
        rows.append(maxpool3(xh))                                             # (C_in, L)
        rhs = _concat_rows(rows)                                              # (1280+C_in, L) bf16
        y = jnp.dot(wc_ref[...], rhs, preferred_element_type=jnp.float32)     # (128, L)
        return jnp.maximum(y, 0.0)     # ReLU inside the module (residual added after)

    x = x_ref[0]                                                              # (1, L) f32

    # ---- stage 1: inception_module_1 (C_in == 1, no bottleneck) + the 17 fixed hybrid
    # filters + the maxpool 1x1, folded into one (152, 145) matmul: 144 im2col rows
    # + 1 maxpool row.  Single-row taps are built in f32 (sublane aligned) and cast once.
    pad_1 = (_K1 - 1) // 2
    rows1 = [_shift0(x, j - pad_1, L, pos) for j in range(_K1)]
    rows1.append(maxpool3(x))
    rhs1 = _concat_rows(rows1).astype(jnp.bfloat16)                           # (145, L)
    fm1 = jnp.maximum(
        jnp.dot(w1_ref[...], rhs1, preferred_element_type=jnp.float32), 0.0)  # (152, L)

    # ---- inception modules 2..6 + residuals (exactly the torch forward ordering)
    fm2 = inception_module(fm1, bn2_ref, wc2_ref)
    fm3 = inception_module(fm2, bn3_ref, wc3_ref)
    fm3r = fm3 + x                       # (128, L) + (1, L) broadcast, as torch does
    fm4 = inception_module(fm3r, bn4_ref, wc4_ref)
    fm5 = inception_module(fm4, bn5_ref, wc5_ref)
    fm6 = inception_module(fm5, bn6_ref, wc6_ref)
    fm6r = fm6 + fm3r

    # ---- GAP + linear head
    gap = jnp.mean(fm6r, axis=1, keepdims=True)                               # (128, 1)
    logits = jnp.dot(lw_ref[...], gap,
                     preferred_element_type=jnp.float32) + lb_ref[...]        # (NC, 1)
    o_ref[0] = logits.astype(o_ref.dtype)


def hinception_forward(params, x):
    """x: (B, 1, L) float32 -> logits (B, num_classes).  One fused pallas_call."""
    assert _ROLL_CALIBRATED, "call calibrate_roll()/init_hinception() before tracing"
    B, c_in, L = x.shape
    assert c_in == 1
    nc = params["linear_w"].shape[0]
    weights = (params["stage1_w"],
               params["inc2"]["bn"], params["inc2"]["wc"],
               params["inc3"]["bn"], params["inc3"]["wc"],
               params["inc4"]["bn"], params["inc4"]["wc"],
               params["inc5"]["bn"], params["inc5"]["wc"],
               params["inc6"]["bn"], params["inc6"]["wc"],
               params["linear_w"], params["linear_b"])
    in_specs = [pl.BlockSpec((1, 1, L), lambda b: (b, 0, 0))]
    in_specs += [pl.BlockSpec(w.shape, lambda b: (0, 0)) for w in weights]
    out = pl.pallas_call(
        functools.partial(_hinception_kernel, L=L),
        out_shape=jax.ShapeDtypeStruct((B, nc, 1), jnp.float32),
        grid=(B,),
        in_specs=in_specs,
        out_specs=pl.BlockSpec((1, nc, 1), lambda b: (b, 0, 0)),
        compiler_params=pltpu.CompilerParams(
            dimension_semantics=("parallel",), vmem_limit_bytes=_VMEM_LIMIT),
    )(x, *weights)
    return out[:, :, 0]


# ----------------------------------------------------------------------------
# Parameter construction (deterministic, in-script)
# ----------------------------------------------------------------------------
def build_custom_filter_bank(in_channels):
    """The 17 fixed (non-trainable) hybrid filters of Hinception (mirrors the torch code)."""
    filters = []
    for ks in (2, 4, 8, 16, 32, 64):          # increase detection
        f = np.ones((1, in_channels, ks))
        f[:, :, np.arange(ks) % 2 == 0] *= -1
        filters.append(f)
    for ks in (2, 4, 8, 16, 32, 64):          # decrease detection
        f = np.ones((1, in_channels, ks))
        f[:, :, np.arange(ks) % 2 > 0] *= -1
        filters.append(f)
    for ks in (6, 12, 24, 48, 96):            # peak detection (actual width ks + ks // 2)
        f = np.zeros((1, in_channels, ks + ks // 2))
        xm = np.linspace(0, 1, ks // 4 + 1)[1:].reshape((-1, 1, 1))
        fl = xm ** 2
        fr = fl[::-1]
        fl = np.transpose(fl, (1, 2, 0))
        fr = np.transpose(fr, (1, 2, 0))
        f[:, :, 0:ks // 4] = -fl
        f[:, :, ks // 4:ks // 2] = -fr
        f[:, :, ks // 2:3 * ks // 4] = 2 * fl
        f[:, :, 3 * ks // 4:ks] = 2 * fr
        f[:, :, ks:5 * ks // 4] = -fl
        f[:, :, 5 * ks // 4:] = -fr
        filters.append(f)
    return [np.asarray(f, np.float32) for f in filters]


def embed_filters(filters, k_target):
    """Embed 'same' convs of different widths into one width-k_target 'same' conv.
    Offset (k_target-1)//2 - (k-1)//2 reproduces torch padding='same' (even & odd k)."""
    c_in = filters[0].shape[1]
    out = []
    for f in filters:
        f = np.asarray(f, np.float32)
        c_out, _, k = f.shape
        off = (k_target - 1) // 2 - (k - 1) // 2
        assert 0 <= off and off + k <= k_target
        g = np.zeros((c_out, c_in, k_target), np.float32)
        g[:, :, off:off + k] = f
        out.append(g)
    return np.concatenate(out, axis=0)


def _flatten_conv_weight(w_oik):
    """(C_out, C_in, K) -> (C_out, K*C_in); flat column j*C_in + ci matches the im2col rows."""
    c_out, c_in, k = w_oik.shape
    return np.transpose(np.asarray(w_oik, np.float32), (0, 2, 1)).reshape(c_out, k * c_in)


def _bf16_round(a):
    """Round to bf16 and back so the kernel (bf16 weights) and the f32 reference agree."""
    return np.asarray(a, np.float32).astype(jnp.bfloat16).astype(np.float32)


def _normal(key, shape, scale=0.05):
    return scale * np.asarray(jax.random.normal(key, shape, jnp.float32))


def _init_module(key, c_in, c_in_ref=None, c_out=_NF, kernel_sizes=(40, 20, 10)):
    """Random InceptionModule weights + their packed/fused kernel form.
    c_in may be padded (>= c_in_ref); the padded input channels are exactly zero."""
    if c_in_ref is None:
        c_in_ref = c_in
    keys = jax.random.split(key, len(kernel_sizes) + 2)
    convs = [_bf16_round(_normal(keys[i], (c_out, c_out, k)))
             for i, k in enumerate(kernel_sizes)]
    bn = _bf16_round(_normal(keys[-2], (c_out, c_in)))
    mx = _bf16_round(_normal(keys[-1], (c_out, c_in)))
    kb = max(kernel_sizes)
    w_br = _flatten_conv_weight(embed_filters(convs, kb))          # (96, kb*32)
    # Block matrix [branch convs | maxpool 1x1]: one MXU matmul -> 128 channels in order.
    wc = np.zeros((4 * c_out, kb * c_out + c_in), np.float32)
    wc[:3 * c_out, :kb * c_out] = w_br
    wc[3 * c_out:, kb * c_out:] = mx
    kernel_p = {"bn": jnp.asarray(bn, jnp.bfloat16),
                "wc": jnp.asarray(wc, jnp.bfloat16)}
    ref_p = {"bn": jnp.asarray(bn[:, :c_in_ref]),
             "convs": [jnp.asarray(c) for c in convs],
             "mx": jnp.asarray(mx[:, :c_in_ref])}
    return kernel_p, ref_p


def init_hinception(key, in_channels, num_classes, num_filters=_NF):
    """Deterministic random weights.  Returns (pallas kernel params, pure-JAX ref params)."""
    # TODO(synk): multivariate input (in_channels > 1) needs a bottleneck in module 1 and a
    # different residual broadcast (torch's `fm3 + x_` only broadcasts cleanly for 1 channel).
    assert in_channels == 1
    calibrate_roll()
    keys = jax.random.split(key, 12)

    inc1_convs = [_bf16_round(_normal(keys[i], (num_filters, in_channels, k)))
                  for i, k in enumerate((40, 20, 10))]
    inc1_mx = _bf16_round(_normal(keys[3], (num_filters, in_channels)))
    custom = [_bf16_round(f) for f in build_custom_filter_bank(in_channels)]

    # Stage-1 fused weight: inc-1 branch convs + maxpool 1x1 + 17 hybrid filters embedded
    # into one width-144 conv + one maxpool column; output padded 145 -> 152 (zero rows).
    n_fm1 = 4 * num_filters + len(custom)          # 145
    c1_pad = -(-n_fm1 // 8) * 8                    # 152
    k1 = _K1 * in_channels
    w1 = np.zeros((c1_pad, k1 + in_channels), np.float32)
    w1[:3 * num_filters, :k1] = _flatten_conv_weight(embed_filters(inc1_convs, _K1))
    w1[3 * num_filters:4 * num_filters, k1:] = inc1_mx
    w1[4 * num_filters:n_fm1, :k1] = _flatten_conv_weight(embed_filters(custom, _K1))

    inc2_k, inc2_r = _init_module(keys[4], c1_pad, c_in_ref=n_fm1)
    inc3_k, inc3_r = _init_module(keys[5], 4 * num_filters)
    inc4_k, inc4_r = _init_module(keys[6], 4 * num_filters)
    inc5_k, inc5_r = _init_module(keys[7], 4 * num_filters)
    inc6_k, inc6_r = _init_module(keys[8], 4 * num_filters)

    lw = _bf16_round(_normal(keys[9], (num_classes, 4 * num_filters)))
    lb = _bf16_round(_normal(keys[10], (num_classes, 1)))

    params = {"stage1_w": jnp.asarray(w1, jnp.bfloat16),
              "inc2": inc2_k, "inc3": inc3_k, "inc4": inc4_k,
              "inc5": inc5_k, "inc6": inc6_k,
              "linear_w": jnp.asarray(lw, jnp.float32),
              "linear_b": jnp.asarray(lb, jnp.float32)}
    ref_params = {"custom": [jnp.asarray(f) for f in custom],
                  "inc1": {"convs": [jnp.asarray(c) for c in inc1_convs],
                           "mx": jnp.asarray(inc1_mx)},
                  "inc2": inc2_r, "inc3": inc3_r, "inc4": inc4_r,
                  "inc5": inc5_r, "inc6": inc6_r,
                  "linear_w": jnp.asarray(lw), "linear_b": jnp.asarray(lb)}
    return params, ref_params


# ----------------------------------------------------------------------------
# Pure-JAX reference (replicates the torch forward with lax.conv) for validation
# ----------------------------------------------------------------------------
def _ref_conv_same(x, w):
    k = w.shape[-1]
    lo = (k - 1) // 2
    return lax.conv_general_dilated(x, w, (1,), [(lo, k - 1 - lo)],
                                    dimension_numbers=("NCH", "OIH", "NCH"))


def _ref_maxpool3(x):
    return lax.reduce_window(x, -jnp.inf, lax.max, (1, 1, 3), (1, 1, 1),
                             [(0, 0), (0, 0), (1, 1)])


def _ref_module(x, p, bottleneck=True):
    xb = _ref_conv_same(x, p["bn"][:, :, None]) if bottleneck else x
    ys = [_ref_conv_same(xb, w) for w in p["convs"]]
    ym = _ref_conv_same(_ref_maxpool3(x), p["mx"][:, :, None])
    return jax.nn.relu(jnp.concatenate(ys + [ym], axis=1))


def hinception_reference(ref_params, x):
    r = ref_params
    custom = jax.nn.relu(jnp.concatenate(
        [_ref_conv_same(x, w) for w in r["custom"]], axis=1))
    fm1 = jnp.concatenate([_ref_module(x, r["inc1"], bottleneck=False), custom], axis=1)
    fm2 = _ref_module(fm1, r["inc2"])
    fm3 = _ref_module(fm2, r["inc3"])
    fm3_ = fm3 + x
    fm4 = _ref_module(fm3_, r["inc4"])
    fm5 = _ref_module(fm4, r["inc5"])
    fm6 = _ref_module(fm5, r["inc6"])
    fm6_ = fm6 + fm3_
    gap = jnp.mean(fm6_, axis=-1)                       # (B, 128)
    return gap @ r["linear_w"].T + r["linear_b"][:, 0]


# ----------------------------------------------------------------------------
# Main
# ----------------------------------------------------------------------------
if __name__ == "__main__":
    B, IN_C, L, NUM_CLASSES = 2, 1, 128, 4

    key = jax.random.PRNGKey(0)
    k_p, k_x = jax.random.split(key)
    params, ref_params = init_hinception(k_p, IN_C, NUM_CLASSES)
    x = jax.random.normal(k_x, (B, IN_C, L), jnp.float32)

    fwd = jax.jit(hinception_forward)
    logits = fwd(params, x)
    jax.block_until_ready(logits)
    assert logits.shape == (B, NUM_CLASSES)
    assert bool(jnp.all(jnp.isfinite(logits)))

    # Validate the fused kernel against a pure-JAX (lax.conv) replica of the torch forward.
    ref = hinception_reference(ref_params, x)
    err = float(jnp.max(jnp.abs(logits - ref)))
    tol = 0.1 * (1.0 + float(jnp.max(jnp.abs(ref))))    # bf16 matmuls across 7 fused stages
    assert err <= tol, f"kernel/reference mismatch: max|diff|={err:.4f} > tol={tol:.4f}"

    print("KERNEL_OK")
</pallas_src>

<mosaic_0001>
module attributes {stable_mosaic.version = 11 : i64} {
  func.func @_roll_probe_kernel(%arg0: memref<8x128xf32, #tpu.memory_space<vmem>>, %arg1: memref<8x128xf32, #tpu.memory_space<vmem>>) attributes {dimension_semantics = [], scalar_prefetch = 0 : i64, scratch_operands = 0 : i64, tpu.core_type = #tpu.core_type<tc>} {
    %c0 = arith.constant 0 : index
    %c0_0 = arith.constant 0 : index
    %0 = vector.load %arg0[%c0, %c0_0] : memref<8x128xf32, #tpu.memory_space<vmem>>, vector<8x128xf32>
    %c5_i32 = arith.constant 5 : i32
    %1 = tpu.dynamic_rotate %0 by %c5_i32 dim 1 : vector<8x128xf32>, i32 -> vector<8x128xf32>
    %c0_1 = arith.constant 0 : index
    %c0_2 = arith.constant 0 : index
    %2 = vector.load %arg1[%c0_1, %c0_2] : memref<8x128xf32, #tpu.memory_space<vmem>>, vector<8x128xf32>
    tpu.vector_store %arg1[%c0_1, %c0_2], %1 {strides = array<i32>} : memref<8x128xf32, #tpu.memory_space<vmem>>, vector<8x128xf32>,
    return
  }
}

</mosaic_0001>

<llo_original>
// kernel: tpu_custom_call.1
$region0: #{tpu_custom_call.1}
  #allocation0 [shape = 'u32[]', space=smem, size = 0x4, offset = 0x4, fixed_abs, tag = 'smem constant byte address 0x4 - core index']
  #allocation1 [shape = 'u32[72,128]{1,0:T(1,128)}', space=vmem, size = 0x9000, scoped, tag = 'internal scratch']
  %s0 = inlined_call_operand.hbm [shape: f32[8,128], index: 0, kind: input, shape index: {}]
  %s1 = inlined_call_operand.hbm [shape: f32[8,128], index: 1, kind: output, shape index: {}]
  %s2 = sld [smem:[#allocation0]]
  $region18: #{tpu_custom_call.1} parent=0
    _
  %s4 = ssub.s32 1, %s2
  %s5 = scalar_select 0, %s4, %s2
  $region1: #{tpu_custom_call.1} parent=0
    #allocation2 [shape = 'u8[4096]{0}', space=vmem, size = 0x1000, scoped, tag = 'input window, operand 0, single buffered']
    #allocation3 [shape = 's32[1]{0}', space=sflag, size = 0x4, scoped, tag = 'scoped memory for tpu_custom_call.1']
    #allocation4 [shape = 's32[1]{0}', space=sflag, size = 0x4, scoped, tag = 'scoped memory for tpu_custom_call.1']
    #allocation5 [shape = 'u8[4096]{0}', space=vmem, size = 0x1000, scoped, tag = 'output window, operand 0, single buffered']
    %6 = vsyncpa [#allocation3], 0
    %7 = vsyncpa [#allocation4], 0
    // Predicated region
    $region2: #{tpu_custom_call.1} parent=1 // pred_check
      _
    $region3: #{tpu_custom_call.1} parent=1 // pred_check_branch
      %9 = sbr.rel (0) target = $region5
    $region4: #{tpu_custom_call.1} parent=1 // pred_region
      %11 = vsyncadd [#allocation3], 0
      %s13 = sshll.u32 %s0, 4
      %s14 = int_to_ptr.hbm [resolvable:$true] %s13
      %s15 = sshll.u32 [#allocation2], 4
      %s16 = int_to_ptr.vmem [resolvable:$true] %s15
      %18 = dma.hbm_to_vmem [thread:$0]  %s14, 128, %s16, [#allocation3]
    $region5: #{tpu_custom_call.1} parent=1 // pred_fallthru
      _
    // Predicated region
    $region6: #{tpu_custom_call.1} parent=1 // pred_check
      _
    $region7: #{tpu_custom_call.1} parent=1 // pred_check_branch
      %20 = sbr.rel (0) target = $region9
    $region8: #{tpu_custom_call.1} parent=1 // pred_region
      %22 = dma.done [#allocation3], 128
    $region9: #{tpu_custom_call.1} parent=1 // pred_fallthru
      _
    %v23 = vld [vmem:[#allocation2] sm:$0xff]
    %24 = vrot.lane.b32.xlu0 %v23, 5
    %v25 = vpop.permute.xlu0 %24
    %26 = vst [vmem:[#allocation5] sm:$0xff] %v25
    // Predicated region
    $region10: #{tpu_custom_call.1} parent=1 // pred_check
      _
    $region11: #{tpu_custom_call.1} parent=1 // pred_check_branch
      %28 = sbr.rel (0) target = $region13
    $region12: #{tpu_custom_call.1} parent=1 // pred_region
      %30 = vsyncadd [#allocation4], 0
      %s32 = sshll.u32 [#allocation5], 4
      %s33 = int_to_ptr.vmem [resolvable:$true] %s32
      %s34 = sshll.u32 %s1, 4
      %s35 = int_to_ptr.hbm [resolvable:$true] %s34
      %37 = dma.vmem_to_hbm [thread:$0]  %s33, 128, %s35, [#allocation4]
    $region13: #{tpu_custom_call.1} parent=1 // pred_fallthru
      _
    // Predicated region
    $region14: #{tpu_custom_call.1} parent=1 // pred_check
      _
    $region15: #{tpu_custom_call.1} parent=1 // pred_check_branch
      %39 = sbr.rel (0) target = $region17
    $region16: #{tpu_custom_call.1} parent=1 // pred_region
      %41 = dma.done [#allocation4], 128
    $region17: #{tpu_custom_call.1} parent=1 // pred_fallthru
      _
    %42 = vsyncpa [#allocation3], 1
    %43 = vsyncpa [#allocation4], 1

</llo_original>
